<compile_context>
chip_gen: v7x
topology: tpu7x:2x2x1
jax: 0.10.0
libtpu: 0.0.40
codegen_flags: <defaults>
</compile_context>

<pallas_src>
import functools

import jax
import jax.numpy as jnp
from jax.experimental import pallas as pl
from jax.experimental.pallas import tpu as pltpu


def _round_up(x, m):
    return ((x + m - 1) // m) * m


def _triplet_kernel(anc_ref, pos_ref, neg_ref, out_ref, acc_ref, *,
                    margin, d_total, d_block, mask_last_d):
    j = pl.program_id(1)

    @pl.when(j == 0)
    def _init():
        acc_ref[...] = jnp.zeros_like(acc_ref)

    a = anc_ref[...].astype(jnp.float32)
    p = pos_ref[...].astype(jnp.float32)
    n = neg_ref[...].astype(jnp.float32)

    dp = a - p
    dn = a - n
    # Fused contribution: (a-p)^2 - (a-n)^2, summed once over the feature dim
    # (halves XLU reduce work, one live (tb, td) f32 intermediate).
    contrib = dp * dp - dn * dn

    if mask_last_d:
        # Ragged last D block: zero out the out-of-range lanes.
        col = j * d_block + jax.lax.broadcasted_iota(
            jnp.int32, contrib.shape, 1)
        contrib = jnp.where(col < d_total, contrib, 0.0)

    # Lane-dense per-row partial sums: (tb,) -> (1, tb).
    acc_ref[...] += jnp.sum(contrib, axis=1).reshape(1, -1)

    @pl.when(j == pl.num_programs(1) - 1)
    def _finalize():
        out_ref[...] = jnp.maximum(margin + acc_ref[...], 0.0)


def _choose_tiles(B, D, itemsize, vmem_cap):
    """Pick (row_tile, d_tile) sized against this generation's VMEM."""
    d_lane = _round_up(D, 128)            # lanes actually resident per row
    # Per (row, lane) element: 3 inputs x 2 pipeline buffers at input dtype,
    # plus headroom for ~3 live f32 intermediates (upcasts / diffs) in-body.
    bytes_per_elem = 6 * itemsize + 12
    budget = max(4 << 20, int(vmem_cap) // 2)
    b8 = _round_up(B, 8)

    rows_cap = budget // (d_lane * bytes_per_elem)

    if rows_cap >= min(b8, 128):
        # Full feature dim fits in a block: single D tile.
        td = D
        if b8 <= 128:
            tb = b8                                       # tiny batch: 1 tile
        else:
            # Target >= ~2 MiB per input block per grid step, capped by the
            # VMEM budget; multi-tile row blocks must be 128-aligned for the
            # lane-dense output.
            rows_target = pl.cdiv(2 << 20, d_lane * itemsize)
            tb = max(128, min((rows_cap // 128) * 128,
                              _round_up(rows_target, 128)))
            if tb >= b8:
                # Keep >= 2 row tiles so both v7x TensorCores get work.
                tb = max(128, (pl.cdiv(b8, 2) // 128) * 128)
    else:
        # Feature dim too large for a full-D block even at minimal rows:
        # split D onto a second ("arbitrary") grid axis with an accumulator.
        tb = min(b8, 128)
        td_cap = budget // (tb * bytes_per_elem)
        td = max(128, (td_cap // 128) * 128)
    return tb, td


def triplet_margin_loss(anc, pos, neg, *, margin=2.0, reduce=True,
                        block_rows=None, block_d=None):
    """Pallas TPU TripletMarginLoss.forward (squared-L2 distances).

    anc/pos/neg: (B, D) arrays (f32 or bf16). Returns a float32 scalar if
    reduce=True, else a float32 vector of shape (B,).
    """
    assert anc.shape == pos.shape == neg.shape
    assert anc.ndim == 2
    B, D = anc.shape
    itemsize = jnp.dtype(anc.dtype).itemsize

    try:
        vmem_cap = int(pltpu.get_tpu_info().vmem_capacity_bytes)
    except Exception:  # pragma: no cover - conservative fallback (v7x-sized)
        vmem_cap = 64 << 20

    tb, td = _choose_tiles(B, D, itemsize, vmem_cap)

    # Optional overrides (testing / tuning).
    if block_rows is not None:
        tb = _round_up(int(block_rows), 8)
    if block_d is not None:
        td = _round_up(int(block_d), 128)
        if td >= D:
            td = D

    # Lane-dense output block (1, tb): with more than one row tile the lane
    # dim must be 128-aligned to satisfy the (8, 128) block constraint.
    if pl.cdiv(B, tb) > 1 and tb % 128 != 0:
        tb = _round_up(tb, 128)

    num_row_tiles = pl.cdiv(B, tb)
    num_d_tiles = pl.cdiv(D, td)
    padded_B = num_row_tiles * tb
    mask_last_d = (td < D) and (D % td != 0)

    # VMEM estimate accounting for lane padding and f32 upcast temporaries.
    td_lane = _round_up(td, 128)
    est_bytes = tb * td_lane * (6 * itemsize + 12) + 64 * tb
    vmem_limit = min(int(vmem_cap * 0.9),
                     max(32 << 20, int(est_bytes * 1.5) + (4 << 20)))

    kernel = functools.partial(
        _triplet_kernel, margin=float(margin), d_total=D, d_block=td,
        mask_last_d=mask_last_d)

    in_spec = pl.BlockSpec((tb, td), lambda i, j: (i, j))
    # TODO(synk): for many-tile short-step configs on v7x, try
    # pipeline_mode=pl.Buffered(3) on the input specs (and shrink tb by 1.5x).
    out = pl.pallas_call(
        kernel,
        out_shape=jax.ShapeDtypeStruct((1, padded_B), jnp.float32),
        grid_spec=pltpu.PrefetchScalarGridSpec(
            num_scalar_prefetch=0,
            grid=(num_row_tiles, num_d_tiles),
            in_specs=[in_spec, in_spec, in_spec],
            out_specs=pl.BlockSpec((1, tb), lambda i, j: (0, i)),
            scratch_shapes=[pltpu.VMEM((1, tb), jnp.float32)],
        ),
        compiler_params=pltpu.CompilerParams(
            dimension_semantics=("parallel", "arbitrary"),
            vmem_limit_bytes=vmem_limit,
        ),
        cost_estimate=pl.CostEstimate(
            flops=6 * B * D + 4 * B,
            transcendentals=0,
            bytes_accessed=3 * B * D * itemsize + B * 4,
        ),
    )(anc, pos, neg)

    # Garbage rows from ragged blocks live only in columns [B:padded_B] and
    # are discarded here, before the mean.
    per_row = out[0, :B]
    if reduce:
        return jnp.mean(per_row)
    return per_row


if __name__ == "__main__":
    # --- small f32 case (single tile, full-D block) ------------------------
    key = jax.random.PRNGKey(0)
    k1, k2, k3 = jax.random.split(key, 3)

    B, D = 8, 32
    anc = jax.random.normal(k1, (B, D), dtype=jnp.float32)
    pos = jax.random.normal(k2, (B, D), dtype=jnp.float32)
    neg = jax.random.normal(k3, (B, D), dtype=jnp.float32)

    loss = triplet_margin_loss(anc, pos, neg, margin=2.0, reduce=True)
    per_row = triplet_margin_loss(anc, pos, neg, margin=2.0, reduce=False)
    jax.block_until_ready((loss, per_row))

    d_pos = jnp.sum((anc - pos) ** 2, axis=1)
    d_neg = jnp.sum((anc - neg) ** 2, axis=1)
    ref_row = jnp.maximum(2.0 + d_pos - d_neg, 0.0)
    ref_mean = jnp.mean(ref_row)
    assert jnp.allclose(loss, ref_mean, atol=1e-5), (loss, ref_mean)
    assert jnp.allclose(per_row, ref_row, atol=1e-5)

    # --- bf16 streaming, multi row-tile + ragged last tile (no input pad) --
    B2, D2 = 300, 64
    k4, k5, k6 = jax.random.split(jax.random.PRNGKey(1), 3)
    anc2 = jax.random.normal(k4, (B2, D2), dtype=jnp.bfloat16)
    pos2 = jax.random.normal(k5, (B2, D2), dtype=jnp.bfloat16)
    neg2 = jax.random.normal(k6, (B2, D2), dtype=jnp.bfloat16)

    loss2 = triplet_margin_loss(anc2, pos2, neg2, margin=2.0, reduce=True,
                                block_rows=128)
    row2 = triplet_margin_loss(anc2, pos2, neg2, margin=2.0, reduce=False,
                               block_rows=128)
    jax.block_until_ready((loss2, row2))

    a32, p32, n32 = (x.astype(jnp.float32) for x in (anc2, pos2, neg2))
    dp2 = jnp.sum((a32 - p32) ** 2, axis=1)
    dn2 = jnp.sum((a32 - n32) ** 2, axis=1)
    ref2 = jnp.maximum(2.0 + dp2 - dn2, 0.0)
    assert jnp.allclose(row2, ref2, rtol=1e-3, atol=1e-3)
    assert jnp.allclose(loss2, jnp.mean(ref2), rtol=1e-3, atol=1e-3)

    # --- f32 D-split path (accumulator + masked ragged last D block) -------
    B3, D3 = 16, 300
    k7, k8, k9 = jax.random.split(jax.random.PRNGKey(2), 3)
    anc3 = jax.random.normal(k7, (B3, D3), dtype=jnp.float32)
    pos3 = jax.random.normal(k8, (B3, D3), dtype=jnp.float32)
    neg3 = jax.random.normal(k9, (B3, D3), dtype=jnp.float32)

    row3 = triplet_margin_loss(anc3, pos3, neg3, margin=2.0, reduce=False,
                               block_d=128)
    loss3 = triplet_margin_loss(anc3, pos3, neg3, margin=2.0, reduce=True,
                                block_d=128)
    jax.block_until_ready((row3, loss3))

    dp3 = jnp.sum((anc3 - pos3) ** 2, axis=1)
    dn3 = jnp.sum((anc3 - neg3) ** 2, axis=1)
    ref3 = jnp.maximum(2.0 + dp3 - dn3, 0.0)
    assert jnp.allclose(row3, ref3, rtol=1e-5, atol=1e-3)
    assert jnp.allclose(loss3, jnp.mean(ref3), rtol=1e-5, atol=1e-3)

    print("KERNEL_OK")
</pallas_src>

<mosaic_0001>
module attributes {stable_mosaic.version = 11 : i64} {
  func.func @_triplet_kernel(%arg0: i32, %arg1: i32, %arg2: memref<8x32xf32, #tpu.memory_space<vmem>>, %arg3: memref<8x32xf32, #tpu.memory_space<vmem>>, %arg4: memref<8x32xf32, #tpu.memory_space<vmem>>, %arg5: memref<1x8xf32, #tpu.memory_space<vmem>>, %arg6: memref<1x8xf32, #tpu.memory_space<vmem>>) attributes {dimension_semantics = [#tpu.dimension_semantics<parallel>, #tpu.dimension_semantics<arbitrary>], iteration_bounds = array<i64: 1, 1>, scalar_prefetch = 0 : i64, scratch_operands = 1 : i64, tpu.core_type = #tpu.core_type<tc>, window_params = [{transform_indices = @transform_0, window_bounds = array<i64: 8, 32>}, {transform_indices = @transform_1, window_bounds = array<i64: 8, 32>}, {transform_indices = @transform_2, window_bounds = array<i64: 8, 32>}, {transform_indices = @transform_3, window_bounds = array<i64: 1, 8>}]} {
    %c0_i32 = arith.constant 0 : i32
    %0 = arith.cmpi eq, %arg1, %c0_i32 : i32
    %1 = arith.extui %0 : i1 to i32
    %c0_i32_0 = arith.constant 0 : i32
    %2 = arith.cmpi ne, %1, %c0_i32_0 : i32
    scf.if %2 {
      %cst_12 = arith.constant 0.000000e+00 : f32
      %19 = vector.broadcast %cst_12 : f32 to vector<1x8xf32>
      %c0_13 = arith.constant 0 : index
      %c0_14 = arith.constant 0 : index
      %20 = vector.load %arg6[%c0_13, %c0_14] : memref<1x8xf32, #tpu.memory_space<vmem>>, vector<1x8xf32>
      tpu.vector_store %arg6[%c0_13, %c0_14], %19 {strides = array<i32>} : memref<1x8xf32, #tpu.memory_space<vmem>>, vector<1x8xf32>,
    } else {
    }
    %c0 = arith.constant 0 : index
    %c0_1 = arith.constant 0 : index
    %3 = vector.load %arg2[%c0, %c0_1] : memref<8x32xf32, #tpu.memory_space<vmem>>, vector<8x32xf32>
    %c0_2 = arith.constant 0 : index
    %c0_3 = arith.constant 0 : index
    %4 = vector.load %arg3[%c0_2, %c0_3] : memref<8x32xf32, #tpu.memory_space<vmem>>, vector<8x32xf32>
    %c0_4 = arith.constant 0 : index
    %c0_5 = arith.constant 0 : index
    %5 = vector.load %arg4[%c0_4, %c0_5] : memref<8x32xf32, #tpu.memory_space<vmem>>, vector<8x32xf32>
    %6 = arith.subf %3, %4 : vector<8x32xf32>
    %7 = arith.subf %3, %5 : vector<8x32xf32>
    %8 = arith.mulf %6, %6 : vector<8x32xf32>
    %9 = arith.mulf %7, %7 : vector<8x32xf32>
    %10 = arith.subf %8, %9 : vector<8x32xf32>
    %c0_6 = arith.constant 0 : index
    %c0_7 = arith.constant 0 : index
    %11 = vector.load %arg6[%c0_6, %c0_7] : memref<1x8xf32, #tpu.memory_space<vmem>>, vector<1x8xf32>
    %cst = arith.constant dense<0.000000e+00> : vector<8xf32>
    %12 = vector.multi_reduction <add>, %10, %cst [1] : vector<8x32xf32> to vector<8xf32>
    %13 = vector.shape_cast %12 : vector<8xf32> to vector<1x8xf32>
    %14 = arith.addf %11, %13 : vector<1x8xf32>
    %c0_8 = arith.constant 0 : index
    %c0_9 = arith.constant 0 : index
    %15 = vector.load %arg6[%c0_8, %c0_9] : memref<1x8xf32, #tpu.memory_space<vmem>>, vector<1x8xf32>
    tpu.vector_store %arg6[%c0_8, %c0_9], %14 {strides = array<i32>} : memref<1x8xf32, #tpu.memory_space<vmem>>, vector<1x8xf32>,
    %c0_i32_10 = arith.constant 0 : i32
    %16 = arith.cmpi eq, %arg1, %c0_i32_10 : i32
    %17 = arith.extui %16 : i1 to i32
    %c0_i32_11 = arith.constant 0 : i32
    %18 = arith.cmpi ne, %17, %c0_i32_11 : i32
    scf.if %18 {
      %c0_12 = arith.constant 0 : index
      %c0_13 = arith.constant 0 : index
      %19 = vector.load %arg6[%c0_12, %c0_13] : memref<1x8xf32, #tpu.memory_space<vmem>>, vector<1x8xf32>
      %cst_14 = arith.constant 2.000000e+00 : f32
      %20 = vector.broadcast %cst_14 : f32 to vector<1x8xf32>
      %21 = arith.addf %20, %19 : vector<1x8xf32>
      %cst_15 = arith.constant 0.000000e+00 : f32
      %22 = vector.broadcast %cst_15 : f32 to vector<1x8xf32>
      %23 = arith.maximumf %21, %22 : vector<1x8xf32>
      %c0_16 = arith.constant 0 : index
      %c0_17 = arith.constant 0 : index
      %24 = vector.load %arg5[%c0_16, %c0_17] : memref<1x8xf32, #tpu.memory_space<vmem>>, vector<1x8xf32>
      tpu.vector_store %arg5[%c0_16, %c0_17], %23 {strides = array<i32>} : memref<1x8xf32, #tpu.memory_space<vmem>>, vector<1x8xf32>,
    } else {
    }
    return
  }
  func.func @transform_0(%arg0: i32, %arg1: i32) -> (i32, i32) {
    %c0_i32 = arith.constant 0 : i32
    return %arg0, %arg1 : i32, i32
  }
  func.func @transform_1(%arg0: i32, %arg1: i32) -> (i32, i32) {
    %c0_i32 = arith.constant 0 : i32
    return %arg0, %arg1 : i32, i32
  }
  func.func @transform_2(%arg0: i32, %arg1: i32) -> (i32, i32) {
    %c0_i32 = arith.constant 0 : i32
    return %arg0, %arg1 : i32, i32
  }
  func.func @transform_3(%arg0: i32, %arg1: i32) -> (i32, i32) {
    %c0_i32 = arith.constant 0 : i32
    %c0_i32_0 = arith.constant 0 : i32
    return %c0_i32, %arg0 : i32, i32
  }
}

</mosaic_0001>

<llo_original>
// kernel: tpu_custom_call.1
$region0: #{tpu_custom_call.1}
  #allocation0 [shape = 'u32[]', space=smem, size = 0x4, offset = 0x4, fixed_abs, tag = 'smem constant byte address 0x4 - core index']
  #allocation1 [shape = 'u32[144,128]{1,0:T(1,128)}', space=vmem, size = 0x12000, scoped, tag = 'internal scratch']
  #allocation2 [shape = 'f32[1,8]{1,0:T(1,128)}', space=vmem, size = 0x200, scoped, tag = 'scratch operand']
  %s0 = inlined_call_operand.hbm [shape: f32[8,32], index: 0, kind: input, shape index: {}]
  %s1 = inlined_call_operand.hbm [shape: f32[8,32], index: 1, kind: input, shape index: {}]
  %s2 = inlined_call_operand.hbm [shape: f32[8,32], index: 2, kind: input, shape index: {}]
  %s3 = inlined_call_operand.hbm [shape: f32[1,8], index: 3, kind: output, shape index: {}]
  %s4 = sld [smem:[#allocation0]]
  $region42: #{tpu_custom_call.1} parent=0
    _
  %s6 = ssub.s32 1, %s4
  %s7 = scalar_select 0, %s6, %s4
  $region1: #{tpu_custom_call.1} parent=0
    #allocation3 [shape = 'u8[4096]{0}', space=vmem, size = 0x1000, scoped, tag = 'input window, operand 0, single buffered']
    #allocation4 [shape = 's32[1]{0}', space=sflag, size = 0x4, scoped, tag = 'scoped memory for tpu_custom_call.1']
    #allocation5 [shape = 's32[1]{0}', space=sflag, size = 0x4, scoped, tag = 'scoped memory for tpu_custom_call.1']
    #allocation6 [shape = 'u8[4096]{0}', space=vmem, size = 0x1000, scoped, tag = 'input window, operand 1, single buffered']
    #allocation7 [shape = 's32[1]{0}', space=sflag, size = 0x4, scoped, tag = 'scoped memory for tpu_custom_call.1']
    #allocation8 [shape = 'u8[4096]{0}', space=vmem, size = 0x1000, scoped, tag = 'input window, operand 2, single buffered']
    #allocation9 [shape = 'u8[512]{0}', space=vmem, size = 0x400, scoped, tag = 'output window, operand 0, single buffered']
    %8 = vsyncpa [#allocation4], 0
    %9 = vsyncpa [#allocation7], 0
    %10 = vsyncpa [#allocation5], 0
    // Predicated region
    $region2: #{tpu_custom_call.1} parent=1 // pred_check
      _
    $region3: #{tpu_custom_call.1} parent=1 // pred_check_branch
      %12 = sbr.rel (0) target = $region5
    $region4: #{tpu_custom_call.1} parent=1 // pred_region
      %s14 = ssub.s32 128, 128
      %15 = vsyncadd [#allocation4], %s14
      %s17 = sshll.u32 [#allocation3], 4
      %s18 = int_to_ptr.vmem [resolvable:$true] %s17
      %20 = dma.hbm_to_vmem [thread:$0]  %s0, 128, %s18, [#allocation4]
    $region5: #{tpu_custom_call.1} parent=1 // pred_fallthru
      _
    // Predicated region
    $region6: #{tpu_custom_call.1} parent=1 // pred_check
      _
    $region7: #{tpu_custom_call.1} parent=1 // pred_check_branch
      %22 = sbr.rel (0) target = $region9
    $region8: #{tpu_custom_call.1} parent=1 // pred_region
      %s24 = ssub.s32 128, 128
      %25 = vsyncadd [#allocation7], %s24
      %s27 = sshll.u32 [#allocation6], 4
      %s28 = int_to_ptr.vmem [resolvable:$true] %s27
      %30 = dma.hbm_to_vmem [thread:$0]  %s1, 128, %s28, [#allocation7]
    $region9: #{tpu_custom_call.1} parent=1 // pred_fallthru
      _
    // Predicated region
    $region10: #{tpu_custom_call.1} parent=1 // pred_check
      _
    $region11: #{tpu_custom_call.1} parent=1 // pred_check_branch
      %32 = sbr.rel (0) target = $region13
    $region12: #{tpu_custom_call.1} parent=1 // pred_region
      %s34 = ssub.s32 128, 128
      %35 = vsyncadd [#allocation7], %s34
      %s37 = sshll.u32 [#allocation8], 4
      %s38 = int_to_ptr.vmem [resolvable:$true] %s37
      %40 = dma.hbm_to_vmem [thread:$0]  %s2, 128, %s38, [#allocation7]
    $region13: #{tpu_custom_call.1} parent=1 // pred_fallthru
      _
    // Predicated region
    $region14: #{tpu_custom_call.1} parent=1 // pred_check
      _
    $region15: #{tpu_custom_call.1} parent=1 // pred_check_branch
      %42 = sbr.rel (0) target = $region17
    $region16: #{tpu_custom_call.1} parent=1 // pred_region
      %43 = dma.done [#allocation4], 128
    $region17: #{tpu_custom_call.1} parent=1 // pred_fallthru
      _
    // Predicated region
    $region18: #{tpu_custom_call.1} parent=1 // pred_check
      _
    $region19: #{tpu_custom_call.1} parent=1 // pred_check_branch
      %45 = sbr.rel (0) target = $region21
    $region20: #{tpu_custom_call.1} parent=1 // pred_region
      %46 = dma.done [#allocation7], 128
    $region21: #{tpu_custom_call.1} parent=1 // pred_fallthru
      _
    // Predicated region
    $region22: #{tpu_custom_call.1} parent=1 // pred_check
      _
    $region23: #{tpu_custom_call.1} parent=1 // pred_check_branch
      %48 = sbr.rel (0) target = $region25
    $region24: #{tpu_custom_call.1} parent=1 // pred_region
      %49 = dma.done [#allocation7], 128
    $region25: #{tpu_custom_call.1} parent=1 // pred_fallthru
      _
    %p50 = scmp.eq.s32.totalorder 0, 0
    // Predicated region
    $region26: #{tpu_custom_call.1} parent=1 // pred_check
      %p51 = pneg %p50
    $region27: #{tpu_custom_call.1} parent=1 // pred_check_branch
      %53 = sbr.rel (%p51) target = $region29
    $region28: #{tpu_custom_call.1} parent=1 // pred_region
      %vm54 = vcmask 57344
      %55 = vst.msk [vmem:[#allocation2] sm:$0x1] %vm54, 0.0
    $region29: #{tpu_custom_call.1} parent=1 // pred_fallthru
      _
    %v56 = vld [vmem:[#allocation3] sm:$0xff]
    %v57 = vld [vmem:[#allocation6] sm:$0xff]
    %v58 = vld [vmem:[#allocation8] sm:$0xff]
    %v59 = vsub.f32 %v56, %v57
    %v60 = vsub.f32 %v56, %v58
    %v61 = vmul.f32 %v59, %v59
    %v62 = vmul.f32 %v60, %v60
    %v63 = vsub.f32 %v61, %v62
    %v64 = vld [vmem:[#allocation2] sm:$0x1]
    %vm65 = vcmask 261120
    %v66 = vsel %vm65, %v63, 0.0
    %67 = vadd.xlane.f32.xlu0 %v66
    %v68 = vpop.xlane.xlu0 %67
    %v70 = vlaneseq
    %v71 = vshrl.u32 %v70, 7
    %v72 = vsub.s32 0, %v71
    %v73 = vrot.slane %v68, %v72
    %v74 = vlaneseq
    %v75 = vshrl.u32 %v74, 7
    %v76 = vsub.s32 1, %v75
    %v77 = vrot.slane %v68, %v76
    %v78 = vlaneseq
    %v79 = vshrl.u32 %v78, 7
    %v80 = vsub.s32 2, %v79
    %v81 = vrot.slane %v68, %v80
    %v82 = vlaneseq
    %v83 = vshrl.u32 %v82, 7
    %v84 = vsub.s32 3, %v83
    %v85 = vrot.slane %v68, %v84
    %v86 = vlaneseq
    %v87 = vshrl.u32 %v86, 7
    %v88 = vsub.s32 4, %v87
    %v89 = vrot.slane %v68, %v88
    %v90 = vlaneseq
    %v91 = vshrl.u32 %v90, 7
    %v92 = vsub.s32 5, %v91
    %v93 = vrot.slane %v68, %v92
    %v94 = vlaneseq
    %v95 = vshrl.u32 %v94, 7
    %v96 = vsub.s32 6, %v95
    %v97 = vrot.slane %v68, %v96
    %v98 = vlaneseq
    %v99 = vshrl.u32 %v98, 7
    %v100 = vsub.s32 7, %v99
    %v101 = vrot.slane %v68, %v100
    %v102 = vcombine.low %v73, %v77
    %v103 = vcombine.low %v81, %v85
    %v104 = vcombine.low %v89, %v93
    %v105 = vcombine.low %v97, %v101
    %v107 = vunpack.c.l.s4 1966171168
    %v108 = vunpack.c.0.s8 %v107
    %v109 = vlaneseq
    %v110 = vshrl.u32 %v109, 7
    %v111 = vsub.s32 %v108, %v110
    %v112 = vrot.slane %v102, %v111
    %v114 = vunpack.c.l.s4 1966171168
    %v115 = vunpack.c.0.s8 %v114
    %v116 = vlaneseq
    %v117 = vshrl.u32 %v116, 7
    %v118 = vsub.s32 %v115, %v117
    %v119 = vrot.slane %v103, %v118
    %v121 = vunpack.c.l.s4 1966171168
    %v122 = vunpack.c.0.s8 %v121
    %v123 = vlaneseq
    %v124 = vshrl.u32 %v123, 7
    %v125 = vsub.s32 %v122, %v124
    %v126 = vrot.slane %v104, %v125
    %v128 = vunpack.c.l.s4 1966171168
    %v129 = vunpack.c.0.s8 %v128
    %v130 = vlaneseq
    %v131 = vshrl.u32 %v130, 7
    %v132 = vsub.s32 %v129, %v131
    %v133 = vrot.slane %v105, %v132
    %v134 = vcombine.low %v112, %v119
    %v135 = vcombine.low %v126, %v133
    %v137 = vunpack.c.l.s4 1966171168
    %v138 = vunpack.c.0.s8 %v137
    %v139 = vlaneseq
    %v140 = vshrl.u32 %v139, 7
    %v141 = vsub.s32 %v138, %v140
    %v142 = vrot.slane %v134, %v141
    %v144 = vunpack.c.l.s4 1966171168
    %v145 = vunpack.c.0.s8 %v144
    %v146 = vlaneseq
    %v147 = vshrl.u32 %v146, 7
    %v148 = vsub.s32 %v145, %v147
    %v149 = vrot.slane %v135, %v148
    %v150 = vcombine.low %v142, %v149
    %151 = vset.pattern.permute.xlu0 0
    %152 = vperm.xlu0 %151, %v150
    %v153 = vpop.permute.xlu0 %152
    %v154 = vlaneseq
    %v155 = vand.u32 %v154, 127
    %v156 = vlaneseq
    %v157 = vshrl.u32 %v156, 7
    %v158 = vsub.s32 %v155, %v157
    %v159 = vrot.slane %v153, %v158
    %v161 = vunpack.c.l.s4 1966171168
    %v162 = vunpack.c.0.s8 %v161
    %v163 = vlaneseq
    %v164 = vshrl.u32 %v163, 7
    %v165 = vsub.s32 %v162, %v164
    %v166 = vrot.slane %v159, %v165
    %v168 = vunpack.c.l.s4 1966171168
    %v169 = vunpack.c.0.s8 %v168
    %v170 = vlaneseq
    %v171 = vshrl.u32 %v170, 7
    %v172 = vsub.s32 %v169, %v171
    %v173 = vrot.slane %v166, %v172
    %v175 = vadd.f32 %v64, %v173
    %vm176 = vcmask 57344
    %177 = vst.msk [vmem:[#allocation2] sm:$0x1] %vm176, %v175
    // Predicated region
    $region30: #{tpu_custom_call.1} parent=1 // pred_check
      %p178 = pneg %p50
    $region31: #{tpu_custom_call.1} parent=1 // pred_check_branch
      %180 = sbr.rel (%p178) target = $region33
    $region32: #{tpu_custom_call.1} parent=1 // pred_region
      %v181 = vld [vmem:[#allocation2] sm:$0x1]
      %v182 = vadd.f32 %v181, 2.0
      %v183 = vmax.f32 %v182, 0.0
      %184 = vst.msk [vmem:[#allocation9] sm:$0x1] %vm176, %v183
    $region33: #{tpu_custom_call.1} parent=1 // pred_fallthru
      _
    // Predicated region
    $region34: #{tpu_custom_call.1} parent=1 // pred_check
      _
    $region35: #{tpu_custom_call.1} parent=1 // pred_check_branch
      %186 = sbr.rel (0) target = $region37
    $region36: #{tpu_custom_call.1} parent=1 // pred_region
      %s188 = ssub.s32 16, 16
      %189 = vsyncadd [#allocation5], %s188
      %s191 = sshll.u32 [#allocation9], 4
      %s192 = int_to_ptr.vmem [resolvable:$true] %s191
      %194 = dma.vmem_to_hbm [thread:$0]  %s192, 16, %s3, [#allocation5]
    $region37: #{tpu_custom_call.1} parent=1 // pred_fallthru
      _
    // Predicated region
    $region38: #{tpu_custom_call.1} parent=1 // pred_check
      _
    $region39: #{tpu_custom_call.1} parent=1 // pred_check_branch
      %196 = sbr.rel (0) target = $region41
    $region40: #{tpu_custom_call.1} parent=1 // pred_region
      %197 = dma.done [#allocation5], 16
    $region41: #{tpu_custom_call.1} parent=1 // pred_fallthru
      _
    %198 = vsyncpa [#allocation4], 1
    %199 = vsyncpa [#allocation7], 1
    %200 = vsyncpa [#allocation5], 1

</llo_original>
